<compile_context>
chip_gen: v5e
topology: v5e:2x2
jax: 0.10.0
libtpu: 0.0.40
codegen_flags: <defaults>
</compile_context>

<pallas_src>
import functools

import numpy as np

import jax
import jax.numpy as jnp
from jax.experimental import pallas as pl
from jax.experimental.pallas import tpu as pltpu


# --------------------------------------------------------------------------------------
# constant 0/1 selection matrices (bf16: 0/1 is exact, halves resident VMEM vs f32)
# --------------------------------------------------------------------------------------
def _selection_matrix_summed(W, fs):
    """(fs*W, W_out): column wo sums all fs*fs spatial taps of output column wo."""
    W_out = W // fs
    P = np.zeros((fs * W, W_out), np.float32)
    for dh in range(fs):
        for dw in range(fs):
            for wo in range(W_out):
                P[dh * W + wo * fs + dw, wo] = 1.0
    return jnp.asarray(P, jnp.bfloat16)


def _selection_matrix_per_tap(W, fs, wpad):
    """(fs*W, fs*fs*wpad): tap s = dh*fs+dw lands in its own 128-aligned chunk s."""
    W_out = W // fs
    P = np.zeros((fs * W, fs * fs * wpad), np.float32)
    for dh in range(fs):
        for dw in range(fs):
            s = dh * fs + dw
            for wo in range(W_out):
                P[dh * W + wo * fs + dw, s * wpad + wo] = 1.0
    return jnp.asarray(P, jnp.bfloat16)


def _vmem_capacity_bytes():
    try:
        info = pltpu.get_tpu_info()
        cap = getattr(info, "vmem_capacity_bytes", None)
        if cap:
            return int(cap)
    except Exception:
        pass
    return 64 * 1024 * 1024  # conservative (v7x-sized) fallback


def _choose_h_tile(H_out, bytes_per_h_row, budget_bytes, batch):
    """Largest multiple-of-8 divisor of H_out under the VMEM budget.

    Prefers tile counts giving batch * n_h >= 2 (ideally even) so both v7x TensorCores
    get work; otherwise takes the largest fitting tile (fewer grid steps on 1-TC chips).
    """
    cands = sorted({d for d in range(8, H_out + 1, 8) if H_out % d == 0} | {H_out})
    fits = [d for d in cands if d * bytes_per_h_row <= budget_bytes]
    if not fits:
        return min(cands)
    multi = [d for d in fits if batch * (H_out // d) >= 2]
    if not multi:
        return max(fits)
    even = [d for d in multi if (batch * (H_out // d)) % 2 == 0]
    return max(even) if even else max(multi)


# --------------------------------------------------------------------------------------
# Fused kernel: causal time padding + space-to-depth + grouped channel mean.
# Grid step = (batch b, H tile h, output frame t).
#   x_ref : (1, C, T, tH, fs*W)   resident across the innermost t axis
#   p_ref : (fs*W, ncols) bf16    only present when fs > 1 (resident, constant index_map)
#   o_ref : (1, C_out, 1, tH, W_out)
# --------------------------------------------------------------------------------------
def _avg_down3d_kernel(*refs, ft, fs, pad_t, gs, factor, aligned, wpad):
    has_p = fs > 1
    x_ref = refs[0]
    p_ref = refs[1] if has_p else None
    o_ref = refs[-1]

    C = x_ref.shape[1]
    tH = x_ref.shape[3]
    Wm = x_ref.shape[4]
    C_out = o_ref.shape[1]
    W_out = o_ref.shape[4]
    fs2 = fs * fs
    inv = 1.0 / float(gs)
    f32_in = x_ref.dtype == jnp.float32

    t = pl.program_id(2)

    if has_p:
        P = p_ref[...]  # bf16 (Wm, ncols)

    # -------- per-tap (dt) decimated / tap-summed results, f32 ------------------------
    g_list = []
    for dt in range(ft):
        t_in = t * ft + dt - pad_t          # traced; negative only for t == 0
        idx = jnp.maximum(t_in, 0)
        fr = x_ref[0, :, pl.ds(idx, 1)][:, 0]            # (C, tH, Wm) in input dtype
        if pad_t > 0 and dt < pad_t:
            # causal front padding: a padded frame contributes exactly 0 to the mean
            fr = fr * (t_in >= 0).astype(fr.dtype)
        if has_p:
            v = fr.reshape(C * tH, Wm)
            if f32_in:
                # exact bf16 hi/lo split -> two exact MXU passes, f32 accumulation
                v_hi = v.astype(jnp.bfloat16)
                v_lo = (v - v_hi.astype(jnp.float32)).astype(jnp.bfloat16)
                g = jnp.dot(v_hi, P, preferred_element_type=jnp.float32)
                g = g + jnp.dot(v_lo, P, preferred_element_type=jnp.float32)
            else:
                # bf16 inputs go straight to the MXU (0/1 weights are exact)
                g = jnp.dot(v, P, preferred_element_type=jnp.float32)
            g = g.reshape(C, tH, g.shape[-1])
        else:
            g = fr.astype(jnp.float32)                   # fs == 1: Wm == W_out
        g_list.append(g)

    # -------- fold group members and write one lane-staged frame ----------------------
    if aligned:
        # each g_dt already sums the fs*fs spatial taps; groups are whole (c, dt) pairs
        if ft == 1:
            pairs = g_list[0]                                        # (C, tH, W_out)
        else:
            pairs = jnp.stack(g_list, axis=1).reshape(C * ft, tH, W_out)  # p = c*ft+dt
        if C * ft == C_out:
            frame_out = pairs
        else:
            frame_out = pairs.reshape(C_out, (C * ft) // C_out, tH, W_out).sum(axis=1)
        frame_out = frame_out * inv
    else:
        # general path: group boundaries cut through the fs*fs tap set; every tap chunk
        # in g starts on a 128-lane boundary so the extracts are clean vreg subsets.
        outs = []
        for o in range(C_out):
            acc = None
            for r in range(gs):
                j = o * gs + r
                c = j // factor
                rem = j % factor
                dt = rem // fs2
                s = rem % fs2
                term = g_list[dt][c, :, s * wpad:(s + 1) * wpad]
                acc = term if acc is None else acc + term
            outs.append(acc)
        frame_out = jnp.stack(outs, axis=0)[:, :, :W_out] * inv

    # single staged store for the whole frame
    o_ref[0, :, 0] = frame_out.astype(o_ref.dtype)


# --------------------------------------------------------------------------------------
# Public wrapper (matches AvgDown3D.forward).  x: (B, C, T, H, W) -> (B, C_out, T', H', W')
# --------------------------------------------------------------------------------------
def avg_down_3d(x, out_channels, factor_t, factor_s=1, *, block_budget_bytes=None):
    B, C, T, H, W = x.shape
    ft, fs = int(factor_t), int(factor_s)
    assert H % fs == 0 and W % fs == 0, "H and W must be divisible by factor_s"
    factor = ft * fs * fs
    assert (C * factor) % out_channels == 0
    gs = (C * factor) // out_channels
    pad_t = (-T) % ft
    T_out = (T + pad_t) // ft
    H_out = H // fs
    W_out = W // fs
    Wm = fs * W
    fs2 = fs * fs
    aligned = (gs % fs2 == 0)
    has_p = fs > 1
    itemsize = x.dtype.itemsize

    # Free (metadata-only) reshape: (B, C, T, H, W) -> (B, C, T, H_out, fs*W).
    x5 = x.reshape(B, C, T, H_out, Wm)

    # generation-aware tile sizing + explicit VMEM limit
    vmem_cap = _vmem_capacity_bytes()
    if block_budget_bytes is None:
        block_budget_bytes = min(vmem_cap // 10, 16 * 1024 * 1024)
    tH = _choose_h_tile(H_out, C * T * Wm * itemsize, block_budget_bytes, B)
    n_h = H_out // tH

    in_specs = [pl.BlockSpec((1, C, T, tH, Wm), lambda b, h, t: (b, 0, 0, h, 0))]
    args = [x5]
    if has_p:
        if aligned:
            wpad = W_out
            P = _selection_matrix_summed(W, fs)          # (fs*W, W_out)
        else:
            wpad = -(-W_out // 128) * 128                # 128-aligned tap chunks
            P = _selection_matrix_per_tap(W, fs, wpad)   # (fs*W, fs*fs*wpad)
        in_specs.append(pl.BlockSpec(P.shape, lambda b, h, t: (0, 0)))
        args.append(P)
    else:
        wpad = W_out
        P = None

    # explicit VMEM limit: double-buffered blocks + per-frame f32 temporaries + headroom
    in_block_bytes = C * T * tH * Wm * itemsize
    out_block_bytes = out_channels * tH * W_out * itemsize
    ncols = (W_out if aligned else fs2 * wpad) if has_p else W_out
    tmp_bytes = ft * C * tH * (3 * Wm + ncols) * 4 + out_channels * tH * W_out * 4
    p_bytes = int(P.size) * 2 if has_p else 0
    need = 2 * in_block_bytes + 2 * out_block_bytes + p_bytes + tmp_bytes + (4 << 20)
    vmem_limit = int(min(int(vmem_cap * 0.85), max(need, 32 << 20)))

    kernel = functools.partial(
        _avg_down3d_kernel,
        ft=ft, fs=fs, pad_t=pad_t, gs=gs, factor=factor, aligned=aligned, wpad=wpad,
    )
    return pl.pallas_call(
        kernel,
        out_shape=jax.ShapeDtypeStruct((B, out_channels, T_out, H_out, W_out), x.dtype),
        grid=(B, n_h, T_out),
        in_specs=in_specs,
        out_specs=pl.BlockSpec(
            (1, out_channels, 1, tH, W_out), lambda b, h, t: (b, 0, t, h, 0)
        ),
        compiler_params=pltpu.CompilerParams(
            dimension_semantics=("parallel", "parallel", "arbitrary"),
            vmem_limit_bytes=vmem_limit,
        ),
    )(*args)


# --------------------------------------------------------------------------------------
# Pure-JAX reference mirroring the PyTorch forward exactly (for correctness checks)
# --------------------------------------------------------------------------------------
def ref_avg_down_3d(x, out_channels, factor_t, factor_s):
    B, C, T, H, W = x.shape
    ft, fs = factor_t, factor_s
    pad_t = (-T) % ft
    x = jnp.pad(x, ((0, 0), (0, 0), (pad_t, 0), (0, 0), (0, 0)))
    Tp = T + pad_t
    factor = ft * fs * fs
    gs = C * factor // out_channels
    x = x.reshape(B, C, Tp // ft, ft, H // fs, fs, W // fs, fs)
    x = jnp.transpose(x, (0, 1, 3, 5, 7, 2, 4, 6))
    x = x.reshape(B, out_channels, gs, Tp // ft, H // fs, W // fs)
    return jnp.mean(x, axis=2)


if __name__ == "__main__":
    key = jax.random.PRNGKey(0)
    cases = [
        # (B, C_in, C_out, factor_t, factor_s, T, H, W)
        (2, 8, 16, 2, 2, 9, 32, 64),   # pad_t=1, aligned groups, 128-wide lane rows
        (2, 6, 16, 2, 2, 4, 16, 32),   # group_size=3 -> general (tap-straddling) path
        (1, 8, 4, 1, 2, 5, 16, 32),    # factor_t=1, channel-reducing (group_size=8)
    ]
    for i, (B, Cin, Cout, ft, fs, T, H, W) in enumerate(cases):
        key, sub = jax.random.split(key)
        x = jax.random.normal(sub, (B, Cin, T, H, W), jnp.float32)

        out = jax.block_until_ready(avg_down_3d(x, Cout, ft, fs))
        T_out = (T + (-T) % ft) // ft
        assert out.shape == (B, Cout, T_out, H // fs, W // fs), out.shape

        ref = jax.block_until_ready(ref_avg_down_3d(x, Cout, ft, fs))
        max_err = float(jnp.max(jnp.abs(out - ref)))
        assert max_err < 1e-3, f"case {i}: max abs err {max_err}"

    # bf16 end-to-end path (no f32 upcast feeding the MXU)
    key, sub = jax.random.split(key)
    xb = jax.random.normal(sub, (2, 8, 9, 32, 64), jnp.bfloat16)
    outb = jax.block_until_ready(avg_down_3d(xb, 16, 2, 2))
    refb = ref_avg_down_3d(xb.astype(jnp.float32), 16, 2, 2)
    max_err_b = float(jnp.max(jnp.abs(outb.astype(jnp.float32) - refb)))
    assert max_err_b < 5e-2, f"bf16 case: max abs err {max_err_b}"

    print("KERNEL_OK")
</pallas_src>

<mosaic_0001>
module attributes {stable_mosaic.version = 11 : i64} {
  func.func @_avg_down3d_kernel(%arg0: i32, %arg1: i32, %arg2: i32, %arg3: memref<1x8x9x16x128xf32, #tpu.memory_space<vmem>>, %arg4: memref<128x32xbf16, #tpu.memory_space<vmem>>, %arg5: memref<1x16x1x16x32xf32, #tpu.memory_space<vmem>>) attributes {dimension_semantics = [#tpu.dimension_semantics<parallel>, #tpu.dimension_semantics<parallel>, #tpu.dimension_semantics<arbitrary>], iteration_bounds = array<i64: 2, 1, 5>, scalar_prefetch = 0 : i64, scratch_operands = 0 : i64, tpu.core_type = #tpu.core_type<tc>, window_params = [{transform_indices = @transform_0, window_bounds = array<i64: 1, 8, 9, 16, 128>}, {pipeline_mode = #tpu.pipeline_mode<synchronous>, transform_indices = @transform_1, window_bounds = array<i64: 128, 32>}, {transform_indices = @transform_2, window_bounds = array<i64: 1, 16, 1, 16, 32>}]} {
    %c0 = arith.constant 0 : index
    %c0_0 = arith.constant 0 : index
    %0 = vector.load %arg4[%c0, %c0_0] : memref<128x32xbf16, #tpu.memory_space<vmem>>, vector<128x32xbf16>
    %c2_i32 = arith.constant 2 : i32
    %1 = arith.muli %arg2, %c2_i32 : i32
    %c0_i32 = arith.constant 0 : i32
    %2 = arith.addi %1, %c0_i32 : i32
    %c1_i32 = arith.constant 1 : i32
    %3 = arith.subi %2, %c1_i32 : i32
    %c0_i32_1 = arith.constant 0 : i32
    %4 = arith.maxsi %3, %c0_i32_1 : i32
    %c0_2 = arith.constant 0 : index
    %c0_3 = arith.constant 0 : index
    %5 = arith.index_cast %4 : i32 to index
    %c0_4 = arith.constant 0 : index
    %c0_5 = arith.constant 0 : index
    %6 = vector.load %arg3[%c0_2, %c0_3, %5, %c0_4, %c0_5] : memref<1x8x9x16x128xf32, #tpu.memory_space<vmem>>, vector<1x8x1x16x128xf32>
    %7 = vector.shape_cast %6 : vector<1x8x1x16x128xf32> to vector<8x1x16x128xf32>
    %8 = vector.shape_cast %7 : vector<8x1x16x128xf32> to vector<8x16x128xf32>
    %c0_i32_6 = arith.constant 0 : i32
    %9 = arith.cmpi sge, %3, %c0_i32_6 : i32
    %10 = arith.extui %9 : i1 to i32
    %11 = arith.sitofp %10 : i32 to f32
    %12 = vector.broadcast %11 : f32 to vector<8x16x128xf32>
    %13 = arith.mulf %8, %12 : vector<8x16x128xf32>
    %14 = vector.shape_cast %13 : vector<8x16x128xf32> to vector<128x128xf32>
    %15 = arith.truncf %14 : vector<128x128xf32> to vector<128x128xbf16>
    %16 = arith.extf %15 : vector<128x128xbf16> to vector<128x128xf32>
    %17 = arith.subf %14, %16 : vector<128x128xf32>
    %18 = arith.truncf %17 : vector<128x128xf32> to vector<128x128xbf16>
    %cst = arith.constant dense<0.000000e+00> : vector<128x32xf32>
    %19 = tpu.matmul %15, %0, %cst {dimension_numbers = #tpu.dot_dimension_numbers<[1], [0], [0], [1], [0, 0, 1, 1], [], []>} : vector<128x128xbf16>, vector<128x32xbf16>, vector<128x32xf32> -> vector<128x32xf32>
    %cst_7 = arith.constant dense<0.000000e+00> : vector<128x32xf32>
    %20 = tpu.matmul %18, %0, %cst_7 {dimension_numbers = #tpu.dot_dimension_numbers<[1], [0], [0], [1], [0, 0, 1, 1], [], []>} : vector<128x128xbf16>, vector<128x32xbf16>, vector<128x32xf32> -> vector<128x32xf32>
    %21 = arith.addf %19, %20 : vector<128x32xf32>
    %22 = vector.shape_cast %21 : vector<128x32xf32> to vector<8x16x32xf32>
    %c2_i32_8 = arith.constant 2 : i32
    %23 = arith.muli %arg2, %c2_i32_8 : i32
    %c1_i32_9 = arith.constant 1 : i32
    %24 = arith.addi %23, %c1_i32_9 : i32
    %c1_i32_10 = arith.constant 1 : i32
    %25 = arith.subi %24, %c1_i32_10 : i32
    %c0_i32_11 = arith.constant 0 : i32
    %26 = arith.maxsi %25, %c0_i32_11 : i32
    %c0_12 = arith.constant 0 : index
    %c0_13 = arith.constant 0 : index
    %27 = arith.index_cast %26 : i32 to index
    %c0_14 = arith.constant 0 : index
    %c0_15 = arith.constant 0 : index
    %28 = vector.load %arg3[%c0_12, %c0_13, %27, %c0_14, %c0_15] : memref<1x8x9x16x128xf32, #tpu.memory_space<vmem>>, vector<1x8x1x16x128xf32>
    %29 = vector.shape_cast %28 : vector<1x8x1x16x128xf32> to vector<8x1x16x128xf32>
    %30 = vector.shape_cast %29 : vector<8x1x16x128xf32> to vector<8x16x128xf32>
    %31 = vector.shape_cast %30 : vector<8x16x128xf32> to vector<128x128xf32>
    %32 = arith.truncf %31 : vector<128x128xf32> to vector<128x128xbf16>
    %33 = arith.extf %32 : vector<128x128xbf16> to vector<128x128xf32>
    %34 = arith.subf %31, %33 : vector<128x128xf32>
    %35 = arith.truncf %34 : vector<128x128xf32> to vector<128x128xbf16>
    %cst_16 = arith.constant dense<0.000000e+00> : vector<128x32xf32>
    %36 = tpu.matmul %32, %0, %cst_16 {dimension_numbers = #tpu.dot_dimension_numbers<[1], [0], [0], [1], [0, 0, 1, 1], [], []>} : vector<128x128xbf16>, vector<128x32xbf16>, vector<128x32xf32> -> vector<128x32xf32>
    %cst_17 = arith.constant dense<0.000000e+00> : vector<128x32xf32>
    %37 = tpu.matmul %35, %0, %cst_17 {dimension_numbers = #tpu.dot_dimension_numbers<[1], [0], [0], [1], [0, 0, 1, 1], [], []>} : vector<128x128xbf16>, vector<128x32xbf16>, vector<128x32xf32> -> vector<128x32xf32>
    %38 = arith.addf %36, %37 : vector<128x32xf32>
    %39 = vector.shape_cast %38 : vector<128x32xf32> to vector<8x16x32xf32>
    %40 = vector.shape_cast %22 : vector<8x16x32xf32> to vector<8x1x16x32xf32>
    %41 = vector.shape_cast %39 : vector<8x16x32xf32> to vector<8x1x16x32xf32>
    %42 = tpu.concatenate %40, %41 in 1 : vector<8x1x16x32xf32>, vector<8x1x16x32xf32> -> vector<8x2x16x32xf32>
    %43 = vector.shape_cast %42 : vector<8x2x16x32xf32> to vector<16x16x32xf32>
    %cst_18 = arith.constant 2.500000e-01 : f32
    %44 = vector.broadcast %cst_18 : f32 to vector<16x16x32xf32>
    %45 = arith.mulf %43, %44 : vector<16x16x32xf32>
    %c0_19 = arith.constant 0 : index
    %c0_20 = arith.constant 0 : index
    %c0_21 = arith.constant 0 : index
    %c0_22 = arith.constant 0 : index
    %c0_23 = arith.constant 0 : index
    %46 = vector.load %arg5[%c0_19, %c0_20, %c0_21, %c0_22, %c0_23] : memref<1x16x1x16x32xf32, #tpu.memory_space<vmem>>, vector<1x16x1x16x32xf32>
    %47 = vector.shape_cast %46 : vector<1x16x1x16x32xf32> to vector<16x16x32xf32>
    %48 = vector.shape_cast %45 : vector<16x16x32xf32> to vector<1x16x1x16x32xf32>
    tpu.vector_store %arg5[%c0_19, %c0_20, %c0_21, %c0_22, %c0_23], %48 {strides = array<i32>} : memref<1x16x1x16x32xf32, #tpu.memory_space<vmem>>, vector<1x16x1x16x32xf32>,
    return
  }
  func.func @transform_0(%arg0: i32, %arg1: i32, %arg2: i32) -> (i32, i32, i32, i32, i32) {
    %c0_i32 = arith.constant 0 : i32
    %c0_i32_0 = arith.constant 0 : i32
    %c0_i32_1 = arith.constant 0 : i32
    %c0_i32_2 = arith.constant 0 : i32
    return %arg0, %c0_i32, %c0_i32_0, %arg1, %c0_i32_1 : i32, i32, i32, i32, i32
  }
  func.func @transform_1(%arg0: i32, %arg1: i32, %arg2: i32) -> (i32, i32) {
    %c0_i32 = arith.constant 0 : i32
    %c0_i32_0 = arith.constant 0 : i32
    %c0_i32_1 = arith.constant 0 : i32
    return %c0_i32, %c0_i32_0 : i32, i32
  }
  func.func @transform_2(%arg0: i32, %arg1: i32, %arg2: i32) -> (i32, i32, i32, i32, i32) {
    %c0_i32 = arith.constant 0 : i32
    %c0_i32_0 = arith.constant 0 : i32
    %c0_i32_1 = arith.constant 0 : i32
    return %arg0, %c0_i32, %arg2, %arg1, %c0_i32_0 : i32, i32, i32, i32, i32
  }
}

</mosaic_0001>

<llo_original>
// kernel: tpu_custom_call.1
$region0: #{tpu_custom_call.1}
  #allocation0 [shape = 'u32[]', space=smem, size = 0x4, offset = 0x4, fixed_abs, tag = 'smem constant byte address 0x4 - core index']
  #allocation1 [shape = 'u32[72,128]{1,0:T(1,128)}', space=vmem, size = 0x9000, scoped, tag = 'internal scratch']
  #allocation6 [shape = 's32[]', space=sflag, size = 0x4, offset = 0, fixed_abs, tag = 'sflag constant byte address 0x0 - dummy sync flag']
  %s0 = inlined_call_operand.hbm [shape: f32[2,8,9,16,128], index: 0, kind: input, shape index: {}]
  %s1 = inlined_call_operand.vmem [shape: bf16[128,32], index: 1, kind: input, shape index: {}]
  %s2 = inlined_call_operand.hbm [shape: f32[2,16,5,16,32], index: 2, kind: output, shape index: {}]
  %s3 = sld [smem:[#allocation0]]
  $region45: #{tpu_custom_call.1} parent=0
    _
  %s5 = ssub.s32 1, %s3
  %s6 = scalar_select 0, %s5, %s3
  $region1: #{tpu_custom_call.1} parent=0
    #allocation2 [shape = 'u8[1179648]{0}', space=vmem, size = 0x120000, scoped, tag = 'input window, operand 0']
    #allocation3 [shape = 's32[2]{0}', space=sflag, size = 0x8, scoped, tag = 'scoped memory for tpu_custom_call.1']
    #allocation4 [shape = 's32[2]{0}', space=sflag, size = 0x8, scoped, tag = 'scoped memory for tpu_custom_call.1']
    #allocation5 [shape = 'u8[262144]{0}', space=vmem, size = 0x40000, scoped, tag = 'output window, operand 0']
    %7 = vsyncpa [#allocation3], 0
    %s8 = scalar_lea.sflag [#allocation3], 1
    %9 = vsyncpa %s8, 0
    %10 = vsyncpa [#allocation4], 0
    %s11 = scalar_lea.sflag [#allocation4], 1
    %12 = vsyncpa %s11, 0
    loop: start=0, step=1, limit=12
    $region2: #{tpu_custom_call.1} parent=1 // loop_pre_header
      _
    $region3: #{tpu_custom_call.1} parent=1 // loop_header
      %s14 = sphi 0, %s18
      %p15 = scmp.ge.s32.totalorder %s14, 12
      %s21 = sphi 0, %s40
      %s22 = sphi 0, %s36
      %s23 = sphi 0, %s32
      %s24 = sphi 0, %s21
      %s25 = sphi 0, %s22
      %s26 = sphi 0, %s23
      %s27 = sphi 0, %s24
      %s28 = sphi 0, %s25
      %s29 = sphi 0, %s26
      %s45 = sphi 0, %s47
      %s48 = sphi 0, %s45
      %s49 = sphi 0, %s48
      %s65 = sphi 0, %s49
      %s69 = sphi 0, %s69
      %s71 = sphi 0, %s69
      %s72 = sphi 0, %s71
      %s86 = sphi 0, %s72
      %s96 = sphi 0, %s98
      %s99 = sphi 0, %s96
      %s100 = sphi 0, %s99
      %s116 = sphi 0, %s100
    $region4: #{tpu_custom_call.1} parent=1 // loop_header_branch
      %17 = sbr.rel (%p15) target = $region8
    $region5: #{tpu_custom_call.1} parent=1 // loop_body
      %s19 = ssub.s32 %s14, 1
      %s20 = ssub.s32 %s14, 2
      %s30 = sadd.s32 1, %s23
      %p31 = scmp.ge.s32.totalorder %s30, 5
      %s32 = scalar_select %p31, 0, %s30
      %s33 = sadd.s32 1, %s22
      %s34 = scalar_select %p31, %s33, %s22
      %p35 = scmp.ge.s32.totalorder %s34, 1
      %s36 = scalar_select %p35, 0, %s34
      %s37 = sadd.s32 1, %s21
      %s38 = scalar_select %p35, %s37, %s21
      %p39 = scmp.ge.s32.totalorder %s38, 2
      %s40 = scalar_select %p39, 0, %s38
      %s41 = ssub.s32 %s21, %s40
      %s42 = ssub.s32 %s22, %s36
      %s43 = sor.u32 %s41, %s42
      %p44 = scmp.eq.s32.totalorder %s43, 0
      %s46 = sadd.s32 %s45, 1
      %s47 = scalar_select %p44, %s45, %s46
      %p50 = pneg %p44
      %p51 = scmp.eq.s32.totalorder %s14, 9
      %p52 = por %p50, %p51
      %p53 = scmp.ne.s32.totalorder %s45, %s48
      %p54 = scmp.eq.s32.totalorder %s14, 0
      %p55 = por %p53, %p54
      %p56 = scmp.ne.s32.totalorder %s45, %s48
      %p57 = scmp.eq.s32.totalorder %s19, 9
      %p58 = por %p56, %p57
      %p59 = scmp.ne.s32.totalorder %s48, %s49
      %p60 = scmp.eq.s32.totalorder %s19, 0
      %p61 = por %p59, %p60
      %p62 = scmp.ne.s32.totalorder %s48, %s49
      %p63 = scmp.eq.s32.totalorder %s20, 9
      %p64 = por %p62, %p63
      %p66 = scmp.ne.s32.totalorder %s49, %s65
      %p67 = scmp.eq.s32.totalorder %s20, 0
      %p68 = por %p66, %p67
      %s70 = sadd.s32 %s69, 1
      %p73 = scmp.eq.s32.totalorder %s14, 9
      %p74 = scmp.ne.s32.totalorder %s69, %s71
      %p75 = scmp.eq.s32.totalorder %s14, 0
      %p76 = por %p74, %p75
      %p77 = scmp.ne.s32.totalorder %s69, %s71
      %p78 = scmp.eq.s32.totalorder %s19, 9
      %p79 = por %p77, %p78
      %p80 = scmp.ne.s32.totalorder %s71, %s72
      %p81 = scmp.eq.s32.totalorder %s19, 0
      %p82 = por %p80, %p81
      %p83 = scmp.ne.s32.totalorder %s71, %s72
      %p84 = scmp.eq.s32.totalorder %s20, 9
      %p85 = por %p83, %p84
      %p87 = scmp.ne.s32.totalorder %s72, %s86
      %p88 = scmp.eq.s32.totalorder %s20, 0
      %p89 = por %p87, %p88
      %s90 = ssub.s32 %s21, %s40
      %s91 = ssub.s32 %s23, %s32
      %s92 = sor.u32 %s90, %s91
      %s93 = ssub.s32 %s22, %s36
      %s94 = sor.u32 %s92, %s93
      %p95 = scmp.eq.s32.totalorder %s94, 0
      %s97 = sadd.s32 %s96, 1
      %s98 = scalar_select %p95, %s96, %s97
      %p101 = pneg %p95
      %p102 = scmp.eq.s32.totalorder %s14, 9
      %p103 = por %p101, %p102
      %p104 = scmp.ne.s32.totalorder %s96, %s99
      %p105 = scmp.eq.s32.totalorder %s14, 0
      %p106 = por %p104, %p105
      %p107 = scmp.ne.s32.totalorder %s96, %s99
      %p108 = scmp.eq.s32.totalorder %s19, 9
      %p109 = por %p107, %p108
      %p110 = scmp.ne.s32.totalorder %s99, %s100
      %p111 = scmp.eq.s32.totalorder %s19, 0
      %p112 = por %p110, %p111
      %p113 = scmp.ne.s32.totalorder %s99, %s100
      %p114 = scmp.eq.s32.totalorder %s20, 9
      %p115 = por %p113, %p114
      %p117 = scmp.ne.s32.totalorder %s100, %s116
      %p118 = scmp.eq.s32.totalorder %s20, 0
      %p119 = por %p117, %p118
      %p120 = scmp.le.s32.totalorder 1, %s14
      %p121 = scmp.lt.s32.totalorder %s14, 11
      %p122 = pnand %p120, %p121
      %p123 = pneg %p122
      // Predicated region
      $region9: #{tpu_custom_call.1} parent=5 // pred_check
        _
      $region10: #{tpu_custom_call.1} parent=5 // pred_check_branch
        %125 = sbr.rel (%p122) target = $region12
      $region11: #{tpu_custom_call.1} parent=5 // pred_region
        %s126 = ssub.s32 %s14, 1
        // Predicated region
        $region13: #{tpu_custom_call.1} parent=11 // pred_check
          %p127 = pneg %p82
        $region14: #{tpu_custom_call.1} parent=11 // pred_check_branch
          %129 = sbr.rel (%p127) target = $region16
        $region15: #{tpu_custom_call.1} parent=11 // pred_region
          _
        $region16: #{tpu_custom_call.1} parent=11 // pred_fallthru
          _
      $region12: #{tpu_custom_call.1} parent=5 // pred_fallthru
        _
      %p130 = scmp.lt.s32.totalorder %s14, 10
      // Predicated region
      $region17: #{tpu_custom_call.1} parent=5 // pred_check
        %p131 = pneg %p130
      $region18: #{tpu_custom_call.1} parent=5 // pred_check_branch
        %133 = sbr.rel (%p131) target = $region20
      $region19: #{tpu_custom_call.1} parent=5 // pred_region
        // Predicated region
        $region21: #{tpu_custom_call.1} parent=19 // pred_check
          %p134 = pneg %p55
        $region22: #{tpu_custom_call.1} parent=19 // pred_check_branch
          %136 = sbr.rel (%p134) target = $region24
        $region23: #{tpu_custom_call.1} parent=19 // pred_region
          %s137 = sand.u32 %s45, 1
          %s138 = scalar_lea.sflag [#allocation3], %s137
          %s139 = sand.u32 %s45, 1
          %s140 = smul.addr %s139, 1152
          %s141 = scalar_lea.vmem [#allocation2], %s140
          %s142 = smul.u32 2, %s22
          %144 = vsyncadd %s138, 0
          %s145 = smul.addr %s21, 144
          %s146 = sadd.s32 %s142, %s145
          %s147 = smul.addr %s146, 8
          %s148 = scalar_lea.hbm %s0, %s147
          %s149 = sshll.u32 %s148, 4
          %s150 = int_to_ptr.hbm [resolvable:$true] %s149
          %s151 = sshll.u32 %s141, 4
          %s152 = int_to_ptr.vmem [resolvable:$true] %s151
          %157 = dma.hbm_to_vmem [thread:$0]  %s150, 18432, %s152, %s138, 128, 128, 8
        $region24: #{tpu_custom_call.1} parent=19 // pred_fallthru
          _
      $region20: #{tpu_custom_call.1} parent=5 // pred_fallthru
        _
      %p158 = scmp.le.s32.totalorder 1, %s14
      %p159 = scmp.lt.s32.totalorder %s14, 11
      %p160 = pnand %p158, %p159
      %p161 = pneg %p160
      // Predicated region
      $region25: #{tpu_custom_call.1} parent=5 // pred_check
        _
      $region26: #{tpu_custom_call.1} parent=5 // pred_check_branch
        %163 = sbr.rel (%p160) target = $region28
      $region27: #{tpu_custom_call.1} parent=5 // pred_region
        %s164 = ssub.s32 %s14, 1
        %s165 = sand.u32 %s48, 1
        %s166 = scalar_lea.sflag [#allocation3], %s165
        %s167 = sand.u32 %s48, 1
        %s168 = smul.addr %s167, 1152
        %s169 = scalar_lea.vmem [#allocation2], %s168
        // Predicated region
        $region29: #{tpu_custom_call.1} parent=27 // pred_check
          %p170 = pneg %p61
        $region30: #{tpu_custom_call.1} parent=27 // pred_check_branch
          %172 = sbr.rel (%p170) target = $region32
        $region31: #{tpu_custom_call.1} parent=27 // pred_region
          %174 = dma.done %s166, 18432
        $region32: #{tpu_custom_call.1} parent=27 // pred_fallthru
          _
        %s175 = sand.u32 %s48, 1
        %s176 = scalar_lea.sflag [#allocation3], %s175
        %s177 = sand.u32 %s48, 1
        %s178 = smul.addr %s177, 1152
        %s179 = scalar_lea.vmem [#allocation2], %s178
        %p180 = pneg %p61
        %p181 = pneg %p58
        %p182 = pneg %p82
        %p183 = pneg %p79
        %p184 = pneg %p112
        %p185 = pneg %p109
        %s186 = sand.u32 %s99, 1
        %s187 = scalar_lea.sflag [#allocation4], %s186
        %s188 = sand.u32 %s99, 1
        %s189 = smul.addr %s188, 256
        %s190 = scalar_lea.vmem [#allocation5], %s189
        %s191 = smul.u32 2, %s25
        %s192 = smul.u32 2, %s25
        %v193 = vld [vmem:[%s1] sm:$0xf]
        %v194 = vld [vmem:[%s1 + $0x4] sm:$0xf]
        %v195 = vld [vmem:[%s1 + $0x8] sm:$0xf]
        %v196 = vld [vmem:[%s1 + $0xc] sm:$0xf]
        %v197 = vld [vmem:[%s1 + $0x10] sm:$0xf]
        %v198 = vld [vmem:[%s1 + $0x14] sm:$0xf]
        %v199 = vld [vmem:[%s1 + $0x18] sm:$0xf]
        %v200 = vld [vmem:[%s1 + $0x1c] sm:$0xf]
        %v201 = vld [vmem:[%s1 + $0x20] sm:$0xf]
        %v202 = vld [vmem:[%s1 + $0x24] sm:$0xf]
        %v203 = vld [vmem:[%s1 + $0x28] sm:$0xf]
        %v204 = vld [vmem:[%s1 + $0x2c] sm:$0xf]
        %v205 = vld [vmem:[%s1 + $0x30] sm:$0xf]
        %v206 = vld [vmem:[%s1 + $0x34] sm:$0xf]
        %v207 = vld [vmem:[%s1 + $0x38] sm:$0xf]
        %v208 = vld [vmem:[%s1 + $0x3c] sm:$0xf]
        %s209 = smul.u32 %s26, 2
        %s210 = sadd.s32 %s209, 4294967295
        %p211 = scmp.gt.s32.totalorder %s210, 0
        %s212 = scalar_select %p211, %s210, 0
        %s213 = smul.u32 %s212, 16
        %s214 = scalar_lea.vmem %s169, %s213 [#allocation2]
        %v215 = vld [vmem:[%s214] sm:$0xff]
        %v216 = vld [vmem:[%s214 + $0x8] sm:$0xff]
        %v217 = vld [vmem:[%s214 + $0x90] sm:$0xff]
        %v218 = vld [vmem:[%s214 + $0x98] sm:$0xff]
        %v219 = vld [vmem:[%s214 + $0x120] sm:$0xff]
        %v220 = vld [vmem:[%s214 + $0x128] sm:$0xff]
        %v221 = vld [vmem:[%s214 + $0x1b0] sm:$0xff]
        %v222 = vld [vmem:[%s214 + $0x1b8] sm:$0xff]
        %v223 = vld [vmem:[%s214 + $0x240] sm:$0xff]
        %v224 = vld [vmem:[%s214 + $0x248] sm:$0xff]
        %v225 = vld [vmem:[%s214 + $0x2d0] sm:$0xff]
        %v226 = vld [vmem:[%s214 + $0x2d8] sm:$0xff]
        %v227 = vld [vmem:[%s214 + $0x360] sm:$0xff]
        %v228 = vld [vmem:[%s214 + $0x368] sm:$0xff]
        %v229 = vld [vmem:[%s214 + $0x3f0] sm:$0xff]
        %v230 = vld [vmem:[%s214 + $0x3f8] sm:$0xff]
        %p231 = scmp.ge.s32.totalorder %s210, 0
        %s232 = scalar_select %p231, 1, 0
        %s233 = scvt.s32.f32 %s232
        %v234 = vstv %s233
        %v235 = vmul.f32 %v215, %v234
        %v236 = vmul.f32 %v216, %v234
        %v237 = vmul.f32 %v217, %v234
        %v238 = vmul.f32 %v218, %v234
        %v239 = vmul.f32 %v219, %v234
        %v240 = vmul.f32 %v220, %v234
        %v241 = vmul.f32 %v221, %v234
        %v242 = vmul.f32 %v222, %v234
        %v243 = vmul.f32 %v223, %v234
        %v244 = vmul.f32 %v224, %v234
        %v245 = vmul.f32 %v225, %v234
        %v246 = vmul.f32 %v226, %v234
        %v247 = vmul.f32 %v227, %v234
        %v248 = vmul.f32 %v228, %v234
        %v249 = vmul.f32 %v229, %v234
        %v250 = vmul.f32 %v230, %v234
        %v251 = vpack.c.bf16 %v235, %v235
        %v252 = vpack.c.bf16 %v236, %v236
        %v253 = vpack.c.bf16 %v237, %v237
        %v254 = vpack.c.bf16 %v238, %v238
        %v255 = vpack.c.bf16 %v239, %v239
        %v256 = vpack.c.bf16 %v240, %v240
        %v257 = vpack.c.bf16 %v241, %v241
        %v258 = vpack.c.bf16 %v242, %v242
        %v259 = vpack.c.bf16 %v243, %v243
        %v260 = vpack.c.bf16 %v244, %v244
        %v261 = vpack.c.bf16 %v245, %v245
        %v262 = vpack.c.bf16 %v246, %v246
        %v263 = vpack.c.bf16 %v247, %v247
        %v264 = vpack.c.bf16 %v248, %v248
        %v265 = vpack.c.bf16 %v249, %v249
        %v266 = vpack.c.bf16 %v250, %v250
        %v267 = vunpack.c.l.bf16 %v251
        %v268 = vunpack.c.l.bf16 %v252
        %v269 = vunpack.c.l.bf16 %v253
        %v270 = vunpack.c.l.bf16 %v254
        %v271 = vunpack.c.l.bf16 %v255
        %v272 = vunpack.c.l.bf16 %v256
        %v273 = vunpack.c.l.bf16 %v257
        %v274 = vunpack.c.l.bf16 %v258
        %v275 = vunpack.c.l.bf16 %v259
        %v276 = vunpack.c.l.bf16 %v260
        %v277 = vunpack.c.l.bf16 %v261
        %v278 = vunpack.c.l.bf16 %v262
        %v279 = vunpack.c.l.bf16 %v263
        %v280 = vunpack.c.l.bf16 %v264
        %v281 = vunpack.c.l.bf16 %v265
        %v282 = vunpack.c.l.bf16 %v266
        %v283 = vsub.f32 %v235, %v267
        %v284 = vsub.f32 %v236, %v268
        %v285 = vsub.f32 %v237, %v269
        %v286 = vsub.f32 %v238, %v270
        %v287 = vsub.f32 %v239, %v271
        %v288 = vsub.f32 %v240, %v272
        %v289 = vsub.f32 %v241, %v273
        %v290 = vsub.f32 %v242, %v274
        %v291 = vsub.f32 %v243, %v275
        %v292 = vsub.f32 %v244, %v276
        %v293 = vsub.f32 %v245, %v277
        %v294 = vsub.f32 %v246, %v278
        %v295 = vsub.f32 %v247, %v279
        %v296 = vsub.f32 %v248, %v280
        %v297 = vsub.f32 %v249, %v281
        %v298 = vsub.f32 %v250, %v282
        %v299 = vpack.c.bf16 %v284, %v283
        %v300 = vpack.c.bf16 %v286, %v285
        %v301 = vpack.c.bf16 %v288, %v287
        %v302 = vpack.c.bf16 %v290, %v289
        %v303 = vpack.c.bf16 %v292, %v291
        %v304 = vpack.c.bf16 %v294, %v293
        %v305 = vpack.c.bf16 %v296, %v295
        %v306 = vpack.c.bf16 %v298, %v297
        %v323 = vunpack.c.l.b16 %v193
        %v324 = vunpack.c.l.b16 %v194
        %v325 = vunpack.c.l.b16 %v195
        %v326 = vunpack.c.l.b16 %v196
        %v327 = vunpack.c.l.b16 %v197
        %v328 = vunpack.c.l.b16 %v198
        %v329 = vunpack.c.l.b16 %v199
        %v330 = vunpack.c.l.b16 %v200
        %v331 = vunpack.c.l.b16 %v201
        %v332 = vunpack.c.l.b16 %v202
        %v333 = vunpack.c.l.b16 %v203
        %v334 = vunpack.c.l.b16 %v204
        %v335 = vunpack.c.l.b16 %v205
        %v336 = vunpack.c.l.b16 %v206
        %v337 = vunpack.c.l.b16 %v207
        %v338 = vunpack.c.l.b16 %v208
        %v339 = vpack.c.b16 %v324, %v323
        %v340 = vpack.c.b16 %v326, %v325
        %v341 = vpack.c.b16 %v328, %v327
        %v342 = vpack.c.b16 %v330, %v329
        %v343 = vpack.c.b16 %v332, %v331
        %v344 = vpack.c.b16 %v334, %v333
        %v345 = vpack.c.b16 %v336, %v335
        %v346 = vpack.c.b16 %v338, %v337
        %355 = vmatpush.bf16.msra.mxu0 %v346
        %356 = vmatpush.bf16.msra.mxu0 %v345
        %357 = vmatpush.bf16.msra.mxu0 %v344
        %358 = vmatpush.bf16.msra.mxu0 %v343
        %359 = vmatpush.bf16.msra.mxu0 %v342
        %360 = vmatpush.bf16.msra.mxu0 %v341
        %361 = vmatpush.bf16.msra.mxu0 %v340
        %362 = vmatpush.bf16.msra.mxu0 %v339
        %363 = vmatmul.bf16.gmra.mxu0 %v299
        %v364 = vpop.f32.mrf.mxu0
        %v365 = vadd.f32 0.0, %v364
        %v366 = vpop.f32.mrf.mxu0
        %v367 = vadd.f32 0.0, %v366
        %368 = vmatmul.bf16.gmra.mxu0 %v300
        %v369 = vpop.f32.mrf.mxu0
        %v370 = vadd.f32 0.0, %v369
        %v371 = vpop.f32.mrf.mxu0
        %v372 = vadd.f32 0.0, %v371
        %373 = vmatmul.bf16.gmra.mxu0 %v301
        %v374 = vpop.f32.mrf.mxu0
        %v375 = vadd.f32 0.0, %v374
        %v376 = vpop.f32.mrf.mxu0
        %v377 = vadd.f32 0.0, %v376
        %378 = vmatmul.bf16.gmra.mxu0 %v302
        %v379 = vpop.f32.mrf.mxu0
        %v380 = vadd.f32 0.0, %v379
        %v381 = vpop.f32.mrf.mxu0
        %v382 = vadd.f32 0.0, %v381
        %383 = vmatmul.bf16.gmra.mxu0 %v303
        %v384 = vpop.f32.mrf.mxu0
        %v385 = vadd.f32 0.0, %v384
        %v386 = vpop.f32.mrf.mxu0
        %v387 = vadd.f32 0.0, %v386
        %388 = vmatmul.bf16.gmra.mxu0 %v304
        %v389 = vpop.f32.mrf.mxu0
        %v390 = vadd.f32 0.0, %v389
        %v391 = vpop.f32.mrf.mxu0
        %v392 = vadd.f32 0.0, %v391
        %393 = vmatmul.bf16.gmra.mxu0 %v305
        %v394 = vpop.f32.mrf.mxu0
        %v395 = vadd.f32 0.0, %v394
        %v396 = vpop.f32.mrf.mxu0
        %v397 = vadd.f32 0.0, %v396
        %398 = vmatmul.bf16.gmra.mxu0 %v306
        %v399 = vpop.f32.mrf.mxu0
        %v400 = vadd.f32 0.0, %v399
        %v401 = vpop.f32.mrf.mxu0
        %v402 = vadd.f32 0.0, %v401
        %403 = vdwg.mxu0
        %v420 = vunpack.c.l.b16 %v251
        %v421 = vunpack.c.l.b16 %v252
        %v422 = vunpack.c.l.b16 %v253
        %v423 = vunpack.c.l.b16 %v254
        %v424 = vunpack.c.l.b16 %v255
        %v425 = vunpack.c.l.b16 %v256
        %v426 = vunpack.c.l.b16 %v257
        %v427 = vunpack.c.l.b16 %v258
        %v428 = vunpack.c.l.b16 %v259
        %v429 = vunpack.c.l.b16 %v260
        %v430 = vunpack.c.l.b16 %v261
        %v431 = vunpack.c.l.b16 %v262
        %v432 = vunpack.c.l.b16 %v263
        %v433 = vunpack.c.l.b16 %v264
        %v434 = vunpack.c.l.b16 %v265
        %v435 = vunpack.c.l.b16 %v266
        %v436 = vpack.c.b16 %v421, %v420
        %v437 = vpack.c.b16 %v423, %v422
        %v438 = vpack.c.b16 %v425, %v424
        %v439 = vpack.c.b16 %v427, %v426
        %v440 = vpack.c.b16 %v429, %v428
        %v441 = vpack.c.b16 %v431, %v430
        %v442 = vpack.c.b16 %v433, %v432
        %v443 = vpack.c.b16 %v435, %v434
        %452 = vmatpush.bf16.msra.mxu0 %v346
        %453 = vmatpush.bf16.msra.mxu0 %v345
        %454 = vmatpush.bf16.msra.mxu0 %v344
        %455 = vmatpush.bf16.msra.mxu0 %v343
        %456 = vmatpush.bf16.msra.mxu0 %v342
        %457 = vmatpush.bf16.msra.mxu0 %v341
        %458 = vmatpush.bf16.msra.mxu0 %v340
        %459 = vmatpush.bf16.msra.mxu0 %v339
        %460 = vmatmul.bf16.gmra.mxu0 %v436
        %v461 = vpop.f32.mrf.mxu0
        %v462 = vadd.f32 %v365, %v461
        %v463 = vpop.f32.mrf.mxu0
        %v464 = vadd.f32 %v367, %v463
        %465 = vmatmul.bf16.gmra.mxu0 %v437
        %v466 = vpop.f32.mrf.mxu0
        %v467 = vadd.f32 %v370, %v466
        %v468 = vpop.f32.mrf.mxu0
        %v469 = vadd.f32 %v372, %v468
        %470 = vmatmul.bf16.gmra.mxu0 %v438
        %v471 = vpop.f32.mrf.mxu0
        %v472 = vadd.f32 %v375, %v471
        %v473 = vpop.f32.mrf.mxu0
        %v474 = vadd.f32 %v377, %v473
        %475 = vmatmul.bf16.gmra.mxu0 %v439
        %v476 = vpop.f32.mrf.mxu0
        %v477 = vadd.f32 %v380, %v476
        %v478 = vpop.f32.mrf.mxu0
        %v479 = vadd.f32 %v382, %v478
        %480 = vmatmul.bf16.gmra.mxu0 %v440
        %v481 = vpop.f32.mrf.mxu0
        %v482 = vadd.f32 %v385, %v481
        %v483 = vpop.f32.mrf.mxu0
        %v484 = vadd.f32 %v387, %v483
        %485 = vmatmul.bf16.gmra.mxu0 %v441
        %v486 = vpop.f32.mrf.mxu0
        %v487 = vadd.f32 %v390, %v486
        %v488 = vpop.f32.mrf.mxu0
        %v489 = vadd.f32 %v392, %v488
        %490 = vmatmul.bf16.gmra.mxu0 %v442
        %v491 = vpop.f32.mrf.mxu0
        %v492 = vadd.f32 %v395, %v491
        %v493 = vpop.f32.mrf.mxu0
        %v494 = vadd.f32 %v397, %v493
        %495 = vmatmul.bf16.gmra.mxu0 %v443
        %v496 = vpop.f32.mrf.mxu0
        %v497 = vadd.f32 %v400, %v496
        %v498 = vpop.f32.mrf.mxu0
        %v499 = vadd.f32 %v402, %v498
        %500 = vdwg.mxu0
        %p501 = scmp.gt.s32.totalorder %s209, 0
        %s502 = scalar_select %p501, %s209, 0
        %s503 = smul.u32 %s502, 16
        %s504 = scalar_lea.vmem %s169, %s503 [#allocation2]
        %v505 = vld [vmem:[%s504] sm:$0xff]
        %v506 = vld [vmem:[%s504 + $0x8] sm:$0xff]
        %v507 = vld [vmem:[%s504 + $0x90] sm:$0xff]
        %v508 = vld [vmem:[%s504 + $0x98] sm:$0xff]
        %v509 = vld [vmem:[%s504 + $0x120] sm:$0xff]
        %v510 = vld [vmem:[%s504 + $0x128] sm:$0xff]
        %v511 = vld [vmem:[%s504 + $0x1b0] sm:$0xff]
        %v512 = vld [vmem:[%s504 + $0x1b8] sm:$0xff]
        %v513 = vld [vmem:[%s504 + $0x240] sm:$0xff]
        %v514 = vld [vmem:[%s504 + $0x248] sm:$0xff]
        %v515 = vld [vmem:[%s504 + $0x2d0] sm:$0xff]
        %v516 = vld [vmem:[%s504 + $0x2d8] sm:$0xff]
        %v517 = vld [vmem:[%s504 + $0x360] sm:$0xff]
        %v518 = vld [vmem:[%s504 + $0x368] sm:$0xff]
        %v519 = vld [vmem:[%s504 + $0x3f0] sm:$0xff]
        %v520 = vld [vmem:[%s504 + $0x3f8] sm:$0xff]
        %v521 = vpack.c.bf16 %v505, %v505
        %v522 = vpack.c.bf16 %v506, %v506
        %v523 = vpack.c.bf16 %v507, %v507
        %v524 = vpack.c.bf16 %v508, %v508
        %v525 = vpack.c.bf16 %v509, %v509
        %v526 = vpack.c.bf16 %v510, %v510
        %v527 = vpack.c.bf16 %v511, %v511
        %v528 = vpack.c.bf16 %v512, %v512
        %v529 = vpack.c.bf16 %v513, %v513
        %v530 = vpack.c.bf16 %v514, %v514
        %v531 = vpack.c.bf16 %v515, %v515
        %v532 = vpack.c.bf16 %v516, %v516
        %v533 = vpack.c.bf16 %v517, %v517
        %v534 = vpack.c.bf16 %v518, %v518
        %v535 = vpack.c.bf16 %v519, %v519
        %v536 = vpack.c.bf16 %v520, %v520
        %v537 = vunpack.c.l.bf16 %v521
        %v538 = vunpack.c.l.bf16 %v522
        %v539 = vunpack.c.l.bf16 %v523
        %v540 = vunpack.c.l.bf16 %v524
        %v541 = vunpack.c.l.bf16 %v525
        %v542 = vunpack.c.l.bf16 %v526
        %v543 = vunpack.c.l.bf16 %v527
        %v544 = vunpack.c.l.bf16 %v528
        %v545 = vunpack.c.l.bf16 %v529
        %v546 = vunpack.c.l.bf16 %v530
        %v547 = vunpack.c.l.bf16 %v531
        %v548 = vunpack.c.l.bf16 %v532
        %v549 = vunpack.c.l.bf16 %v533
        %v550 = vunpack.c.l.bf16 %v534
        %v551 = vunpack.c.l.bf16 %v535
        %v552 = vunpack.c.l.bf16 %v536
        %v553 = vsub.f32 %v505, %v537
        %v554 = vsub.f32 %v506, %v538
        %v555 = vsub.f32 %v507, %v539
        %v556 = vsub.f32 %v508, %v540
        %v557 = vsub.f32 %v509, %v541
        %v558 = vsub.f32 %v510, %v542
        %v559 = vsub.f32 %v511, %v543
        %v560 = vsub.f32 %v512, %v544
        %v561 = vsub.f32 %v513, %v545
        %v562 = vsub.f32 %v514, %v546
        %v563 = vsub.f32 %v515, %v547
        %v564 = vsub.f32 %v516, %v548
        %v565 = vsub.f32 %v517, %v549
        %v566 = vsub.f32 %v518, %v550
        %v567 = vsub.f32 %v519, %v551
        %v568 = vsub.f32 %v520, %v552
        %v569 = vpack.c.bf16 %v554, %v553
        %v570 = vpack.c.bf16 %v556, %v555
        %v571 = vpack.c.bf16 %v558, %v557
        %v572 = vpack.c.bf16 %v560, %v559
        %v573 = vpack.c.bf16 %v562, %v561
        %v574 = vpack.c.bf16 %v564, %v563
        %v575 = vpack.c.bf16 %v566, %v565
        %v576 = vpack.c.bf16 %v568, %v567
        %577 = vmatpush.bf16.msra.mxu0 %v346
        %578 = vmatpush.bf16.msra.mxu0 %v345
        %579 = vmatpush.bf16.msra.mxu0 %v344
        %580 = vmatpush.bf16.msra.mxu0 %v343
        %581 = vmatpush.bf16.msra.mxu0 %v342
        %582 = vmatpush.bf16.msra.mxu0 %v341
        %583 = vmatpush.bf16.msra.mxu0 %v340
        %584 = vmatpush.bf16.msra.mxu0 %v339
        %585 = vmatmul.bf16.gmra.mxu0 %v569
        %v586 = vpop.f32.mrf.mxu0
        %v587 = vadd.f32 0.0, %v586
        %v588 = vpop.f32.mrf.mxu0
        %v589 = vadd.f32 0.0, %v588
        %590 = vmatmul.bf16.gmra.mxu0 %v570
        %v591 = vpop.f32.mrf.mxu0
        %v592 = vadd.f32 0.0, %v591
        %v593 = vpop.f32.mrf.mxu0
        %v594 = vadd.f32 0.0, %v593
        %595 = vmatmul.bf16.gmra.mxu0 %v571
        %v596 = vpop.f32.mrf.mxu0
        %v597 = vadd.f32 0.0, %v596
        %v598 = vpop.f32.mrf.mxu0
        %v599 = vadd.f32 0.0, %v598
        %600 = vmatmul.bf16.gmra.mxu0 %v572
        %v601 = vpop.f32.mrf.mxu0
        %v602 = vadd.f32 0.0, %v601
        %v603 = vpop.f32.mrf.mxu0
        %v604 = vadd.f32 0.0, %v603
        %605 = vmatmul.bf16.gmra.mxu0 %v573
        %v606 = vpop.f32.mrf.mxu0
        %v607 = vadd.f32 0.0, %v606
        %v608 = vpop.f32.mrf.mxu0
        %v609 = vadd.f32 0.0, %v608
        %610 = vmatmul.bf16.gmra.mxu0 %v574
        %v611 = vpop.f32.mrf.mxu0
        %v612 = vadd.f32 0.0, %v611
        %v613 = vpop.f32.mrf.mxu0
        %v614 = vadd.f32 0.0, %v613
        %615 = vmatmul.bf16.gmra.mxu0 %v575
        %v616 = vpop.f32.mrf.mxu0
        %v617 = vadd.f32 0.0, %v616
        %v618 = vpop.f32.mrf.mxu0
        %v619 = vadd.f32 0.0, %v618
        %620 = vmatmul.bf16.gmra.mxu0 %v576
        %v621 = vpop.f32.mrf.mxu0
        %v622 = vadd.f32 0.0, %v621
        %v623 = vpop.f32.mrf.mxu0
        %v624 = vadd.f32 0.0, %v623
        %625 = vdwg.mxu0
        %v642 = vunpack.c.l.b16 %v521
        %v643 = vunpack.c.l.b16 %v522
        %v644 = vunpack.c.l.b16 %v523
        %v645 = vunpack.c.l.b16 %v524
        %v646 = vunpack.c.l.b16 %v525
        %v647 = vunpack.c.l.b16 %v526
        %v648 = vunpack.c.l.b16 %v527
        %v649 = vunpack.c.l.b16 %v528
        %v650 = vunpack.c.l.b16 %v529
        %v651 = vunpack.c.l.b16 %v530
        %v652 = vunpack.c.l.b16 %v531
        %v653 = vunpack.c.l.b16 %v532
        %v654 = vunpack.c.l.b16 %v533
        %v655 = vunpack.c.l.b16 %v534
        %v656 = vunpack.c.l.b16 %v535
        %v657 = vunpack.c.l.b16 %v536
        %v658 = vpack.c.b16 %v643, %v642
        %v659 = vpack.c.b16 %v645, %v644
        %v660 = vpack.c.b16 %v647, %v646
        %v661 = vpack.c.b16 %v649, %v648
        %v662 = vpack.c.b16 %v651, %v650
        %v663 = vpack.c.b16 %v653, %v652
        %v664 = vpack.c.b16 %v655, %v654
        %v665 = vpack.c.b16 %v657, %v656
        %674 = vmatpush.bf16.msra.mxu0 %v346
        %675 = vmatpush.bf16.msra.mxu0 %v345
        %676 = vmatpush.bf16.msra.mxu0 %v344
        %677 = vmatpush.bf16.msra.mxu0 %v343
        %678 = vmatpush.bf16.msra.mxu0 %v342
        %679 = vmatpush.bf16.msra.mxu0 %v341
        %680 = vmatpush.bf16.msra.mxu0 %v340
        %681 = vmatpush.bf16.msra.mxu0 %v339
        %682 = vmatmul.bf16.gmra.mxu0 %v658
        %v683 = vpop.f32.mrf.mxu0
        %v684 = vadd.f32 %v587, %v683
        %v685 = vpop.f32.mrf.mxu0
        %v686 = vadd.f32 %v589, %v685
        %687 = vmatmul.bf16.gmra.mxu0 %v659
        %v688 = vpop.f32.mrf.mxu0
        %v689 = vadd.f32 %v592, %v688
        %v690 = vpop.f32.mrf.mxu0
        %v691 = vadd.f32 %v594, %v690
        %692 = vmatmul.bf16.gmra.mxu0 %v660
        %v693 = vpop.f32.mrf.mxu0
        %v694 = vadd.f32 %v597, %v693
        %v695 = vpop.f32.mrf.mxu0
        %v696 = vadd.f32 %v599, %v695
        %697 = vmatmul.bf16.gmra.mxu0 %v661
        %v698 = vpop.f32.mrf.mxu0
        %v699 = vadd.f32 %v602, %v698
        %v700 = vpop.f32.mrf.mxu0
        %v701 = vadd.f32 %v604, %v700
        %702 = vmatmul.bf16.gmra.mxu0 %v662
        %v703 = vpop.f32.mrf.mxu0
        %v704 = vadd.f32 %v607, %v703
        %v705 = vpop.f32.mrf.mxu0
        %v706 = vadd.f32 %v609, %v705
        %707 = vmatmul.bf16.gmra.mxu0 %v663
        %v708 = vpop.f32.mrf.mxu0
        %v709 = vadd.f32 %v612, %v708
        %v710 = vpop.f32.mrf.mxu0
        %v711 = vadd.f32 %v614, %v710
        %712 = vmatmul.bf16.gmra.mxu0 %v664
        %v713 = vpop.f32.mrf.mxu0
        %v714 = vadd.f32 %v617, %v713
        %v715 = vpop.f32.mrf.mxu0
        %v716 = vadd.f32 %v619, %v715
        %717 = vmatmul.bf16.gmra.mxu0 %v665
        %v718 = vpop.f32.mrf.mxu0
        %v719 = vadd.f32 %v622, %v718
        %v720 = vpop.f32.mrf.mxu0
        %v721 = vadd.f32 %v624, %v720
        %722 = vdwg.mxu0
        %v723 = vmul.f32 %v462, 0.25
        %v724 = vmul.f32 %v464, 0.25
        %v725 = vmul.f32 %v684, 0.25
        %v726 = vmul.f32 %v686, 0.25
        %v727 = vmul.f32 %v467, 0.25
        %v728 = vmul.f32 %v469, 0.25
        %v729 = vmul.f32 %v689, 0.25
        %v730 = vmul.f32 %v691, 0.25
        %v731 = vmul.f32 %v472, 0.25
        %v732 = vmul.f32 %v474, 0.25
        %v733 = vmul.f32 %v694, 0.25
        %v734 = vmul.f32 %v696, 0.25
        %v735 = vmul.f32 %v477, 0.25
        %v736 = vmul.f32 %v479, 0.25
        %v737 = vmul.f32 %v699, 0.25
        %v738 = vmul.f32 %v701, 0.25
        %v739 = vmul.f32 %v482, 0.25
        %v740 = vmul.f32 %v484, 0.25
        %v741 = vmul.f32 %v704, 0.25
        %v742 = vmul.f32 %v706, 0.25
        %v743 = vmul.f32 %v487, 0.25
        %v744 = vmul.f32 %v489, 0.25
        %v745 = vmul.f32 %v709, 0.25
        %v746 = vmul.f32 %v711, 0.25
        %v747 = vmul.f32 %v492, 0.25
        %v748 = vmul.f32 %v494, 0.25
        %v749 = vmul.f32 %v714, 0.25
        %v750 = vmul.f32 %v716, 0.25
        %v751 = vmul.f32 %v497, 0.25
        %v752 = vmul.f32 %v499, 0.25
        %v753 = vmul.f32 %v719, 0.25
        %v754 = vmul.f32 %v721, 0.25
        %vm755 = vcmask 261120
        %756 = vst.msk [vmem:[%s190] sm:$0xff] %vm755, %v723
        %757 = vst.msk [vmem:[%s190 + $0x8] sm:$0xff] %vm755, %v724
        %758 = vst.msk [vmem:[%s190 + $0x10] sm:$0xff] %vm755, %v725
        %759 = vst.msk [vmem:[%s190 + $0x18] sm:$0xff] %vm755, %v726
        %760 = vst.msk [vmem:[%s190 + $0x20] sm:$0xff] %vm755, %v727
        %761 = vst.msk [vmem:[%s190 + $0x28] sm:$0xff] %vm755, %v728
        %762 = vst.msk [vmem:[%s190 + $0x30] sm:$0xff] %vm755, %v729
        %763 = vst.msk [vmem:[%s190 + $0x38] sm:$0xff] %vm755, %v730
        %764 = vst.msk [vmem:[%s190 + $0x40] sm:$0xff] %vm755, %v731
        %765 = vst.msk [vmem:[%s190 + $0x48] sm:$0xff] %vm755, %v732
        %766 = vst.msk [vmem:[%s190 + $0x50] sm:$0xff] %vm755, %v733
        %767 = vst.msk [vmem:[%s190 + $0x58] sm:$0xff] %vm755, %v734
        %768 = vst.msk [vmem:[%s190 + $0x60] sm:$0xff] %vm755, %v735
        %769 = vst.msk [vmem:[%s190 + $0x68] sm:$0xff] %vm755, %v736
        %770 = vst.msk [vmem:[%s190 + $0x70] sm:$0xff] %vm755, %v737
        %771 = vst.msk [vmem:[%s190 + $0x78] sm:$0xff] %vm755, %v738
        %772 = vst.msk [vmem:[%s190 + $0x80] sm:$0xff] %vm755, %v739
        %773 = vst.msk [vmem:[%s190 + $0x88] sm:$0xff] %vm755, %v740
        %774 = vst.msk [vmem:[%s190 + $0x90] sm:$0xff] %vm755, %v741
        %775 = vst.msk [vmem:[%s190 + $0x98] sm:$0xff] %vm755, %v742
        %776 = vst.msk [vmem:[%s190 + $0xa0] sm:$0xff] %vm755, %v743
        %777 = vst.msk [vmem:[%s190 + $0xa8] sm:$0xff] %vm755, %v744
        %778 = vst.msk [vmem:[%s190 + $0xb0] sm:$0xff] %vm755, %v745
        %779 = vst.msk [vmem:[%s190 + $0xb8] sm:$0xff] %vm755, %v746
        %780 = vst.msk [vmem:[%s190 + $0xc0] sm:$0xff] %vm755, %v747
        %781 = vst.msk [vmem:[%s190 + $0xc8] sm:$0xff] %vm755, %v748
        %782 = vst.msk [vmem:[%s190 + $0xd0] sm:$0xff] %vm755, %v749
        %783 = vst.msk [vmem:[%s190 + $0xd8] sm:$0xff] %vm755, %v750
        %784 = vst.msk [vmem:[%s190 + $0xe0] sm:$0xff] %vm755, %v751
        %785 = vst.msk [vmem:[%s190 + $0xe8] sm:$0xff] %vm755, %v752
        %786 = vst.msk [vmem:[%s190 + $0xf0] sm:$0xff] %vm755, %v753
        %787 = vst.msk [vmem:[%s190 + $0xf8] sm:$0xff] %vm755, %v754
        %s788 = sand.u32 %s99, 1
        %s789 = scalar_lea.sflag [#allocation4], %s788
        %s790 = sand.u32 %s99, 1
        %s791 = smul.addr %s790, 256
        %s792 = scalar_lea.vmem [#allocation5], %s791
        // Predicated region
        $region33: #{tpu_custom_call.1} parent=27 // pred_check
          %p793 = pneg %p109
        $region34: #{tpu_custom_call.1} parent=27 // pred_check_branch
          %795 = sbr.rel (%p793) target = $region36
        $region35: #{tpu_custom_call.1} parent=27 // pred_region
          #allocation7 [shape = 'u32[6]{0}', space=smem, size = 0x18, scoped, tag = 'DMA stride descriptor']
          %s796 = smul.u32 2, %s25
          %798 = vsyncadd %s789, 0
          %s799 = smul.addr %s26, 2
          %s800 = sadd.s32 %s796, %s799
          %s801 = smul.addr %s24, 160
          %s802 = sadd.s32 %s800, %s801
          %s803 = smul.addr %s802, 8
          %s804 = scalar_lea.hbm %s2, %s803
          %s806 = sshll.u32 1, 14
          %s807 = sxor.u32 4294967295, %s806
          %s810 = sshll.u32 7, 18
          %s811 = sxor.u32 4294967295, %s810
          %s812 = sand.u32 0, %s811
          %s814 = sor.u32 %s812, 0
          %s815 = sshll.u32 %s792, 4
          %s816 = int_to_ptr.vmem [resolvable:$true] %s815
          %s817 = sshll.u32 %s804, 4
          %s818 = int_to_ptr.hbm [resolvable:$true] %s817
          %824 = sst [smem:[#allocation7]] 256
          %s825 = scalar_lea.smem [#allocation7], 1
          %826 = sst [smem:[%s825]] 1280
          %s827 = scalar_lea.smem [#allocation7], 2
          %828 = sst [smem:[%s827]] 2
          %s829 = scalar_lea.smem [#allocation7], 3
          %830 = sst [smem:[%s829]] 128
          %s831 = scalar_lea.smem [#allocation7], 4
          %832 = sst [smem:[%s831]] 128
          %s833 = scalar_lea.smem [#allocation7], 5
          %834 = sst [smem:[%s833]] 8
          %836 = dma.general %s816, 4096, %s818, %s789, [#allocation6], [#allocation7], %s814, 0
        $region36: #{tpu_custom_call.1} parent=27 // pred_fallthru
          _
      $region28: #{tpu_custom_call.1} parent=5 // pred_fallthru
        _
      %p837 = scmp.le.s32.totalorder 2, %s14
      // Predicated region
      $region37: #{tpu_custom_call.1} parent=5 // pred_check
        %p838 = pneg %p837
      $region38: #{tpu_custom_call.1} parent=5 // pred_check_branch
        %840 = sbr.rel (%p838) target = $region40
      $region39: #{tpu_custom_call.1} parent=5 // pred_region
        %s841 = ssub.s32 %s14, 2
        // Predicated region
        $region41: #{tpu_custom_call.1} parent=39 // pred_check
          %p842 = pneg %p115
        $region42: #{tpu_custom_call.1} parent=39 // pred_check_branch
          %844 = sbr.rel (%p842) target = $region44
        $region43: #{tpu_custom_call.1} parent=39 // pred_region
          %s845 = sand.u32 %s100, 1
          %s846 = scalar_lea.sflag [#allocation4], %s845
          %s847 = sand.u32 %s100, 1
          %s848 = smul.addr %s847, 256
          %s849 = scalar_lea.vmem [#allocation5], %s848
          %851 = dma.done %s846, 4096
        $region44: #{tpu_custom_call.1} parent=39 // pred_fallthru
          _
      $region40: #{tpu_custom_call.1} parent=5 // pred_fallthru
        _
    $region6: #{tpu_custom_call.1} parent=1 // loop_footer
      %s18 = sadd.s32 1, %s14
    $region7: #{tpu_custom_call.1} parent=1 // loop_footer_branch
      %13 = sbr.rel target = $region3
    $region8: #{tpu_custom_call.1} parent=1 // loop_exit
      _
    %852 = vsyncpa [#allocation3], 1
    %s853 = scalar_lea.sflag [#allocation3], 1
    %854 = vsyncpa %s853, 1
    %855 = vsyncpa [#allocation4], 1
    %s856 = scalar_lea.sflag [#allocation4], 1
    %857 = vsyncpa %s856, 1

</llo_original>
